<compile_context>
chip_gen: v6e
topology: v6e:2x2x1
jax: 0.10.0
libtpu: 0.0.40
codegen_flags: <defaults>
</compile_context>

<pallas_src>
import functools

import jax
import jax.numpy as jnp
from jax.experimental import pallas as pl
from jax.experimental.pallas import tpu as pltpu


# ----------------------------------------------------------------------------
# Static layout of the packed parameter slabs
# ----------------------------------------------------------------------------
def _round_up(v, m):
    return (v + m - 1) // m * m


def _make_layout(dim, L):
    """Column/row offsets (all statically derived from dim, latent_dim)."""
    H1 = 10 * (dim + 1)   # encoder hidden
    H2 = 10 * (L + 1)     # decoder hidden 1
    H3 = 4 * (L + 1)      # decoder hidden 2

    # --- row-vector slab: biases + the single "condition" rows of the concat
    # layers.  Each entry starts at a 128-aligned column (cheap aligned loads).
    vec_entries = [
        ("e_b1", H1), ("e_w1_c", H1), ("e_b2", L),
        ("hs_b1", 4 * L), ("hs_b2", 2 * L),
        ("d_b1", H2), ("d_w1_c", H2), ("d_b2", H3), ("d_b3", dim),
    ]
    vec_off = {}
    col = 0
    for name, w in vec_entries:
        vec_off[name] = (col, w)
        col += _round_up(w, 128)
    vec_width = col

    # --- weight slab: every matrix in its own row band, row start 8-aligned,
    # column start 0.  Width = widest matrix rounded to a 128 multiple.
    w_entries = [
        ("e_w1_x", dim, H1),
        ("e_w2", H1, L),
        ("hs_w1", L, 4 * L),        # [m_w1 | s_w1]
        ("hs_w2", 4 * L, 2 * L),    # block-diag(m_w2, s_w2)
        ("d_w1_lat", L, H2),
        ("d_w2", H2, H3),
        ("d_w3", H3, dim),
    ]
    w_off = {}
    row = 0
    max_c = 0
    for name, r, c in w_entries:
        w_off[name] = (row, r, c)
        row += _round_up(r, 8)
        max_c = max(max_c, c)
    w_rows = _round_up(row, 8)
    w_cols = _round_up(max_c, 128)

    return dict(H1=H1, H2=H2, H3=H3,
                vec_off=vec_off, vec_width=vec_width,
                w_off=w_off, w_rows=w_rows, w_cols=w_cols)


# ----------------------------------------------------------------------------
# Parameter construction + packing
# ----------------------------------------------------------------------------
def init_params(key, dim, L):
    """Synthetic parameters with the same shapes/init as the torch module.

    Weights are stored [in_features, out_features] (transpose of nn.Linear
    storage, identical math: y = x @ W + b).
    """
    def lin(k, fi, fo):
        kw, kb = jax.random.split(k)
        bound = 1.0 / jnp.sqrt(fi)
        w = jax.random.uniform(kw, (fi, fo), jnp.float32, -bound, bound)
        b = jax.random.uniform(kb, (fo,), jnp.float32, -bound, bound)
        return w, b

    ks = jax.random.split(key, 9)
    H1 = 10 * (dim + 1)
    Ld = L + 1
    H2 = 10 * Ld
    H3 = 4 * Ld

    p = {}
    p["e_w1"], p["e_b1"] = lin(ks[0], dim + 1, H1)   # encoder layer 1
    p["e_w2"], p["e_b2"] = lin(ks[1], H1, L)         # encoder layer 2
    p["m_w1"], p["m_b1"] = lin(ks[2], L, 2 * L)      # mu head
    p["m_w2"], p["m_b2"] = lin(ks[3], 2 * L, L)
    p["s_w1"], p["s_b1"] = lin(ks[4], L, 2 * L)      # sigma head
    p["s_w2"], p["s_b2"] = lin(ks[5], 2 * L, L)
    p["d_w1"], p["d_b1"] = lin(ks[6], Ld, H2)        # decoder
    p["d_w2"], p["d_b2"] = lin(ks[7], H2, H3)
    p["d_w3"], p["d_b3"] = lin(ks[8], H3, dim)
    return p


def pack_params(p, dim, L):
    """Pack raw parameters into (vec_slab, weight_slab) for the kernel."""
    lay = _make_layout(dim, L)

    # fused mu/sigma head
    hs_w1 = jnp.concatenate([p["m_w1"], p["s_w1"]], axis=1)          # (L, 4L)
    hs_b1 = jnp.concatenate([p["m_b1"], p["s_b1"]], axis=0)          # (4L,)
    hs_w2 = jnp.zeros((4 * L, 2 * L), jnp.float32)
    hs_w2 = hs_w2.at[:2 * L, :L].set(p["m_w2"]).at[2 * L:, L:].set(p["s_w2"])
    hs_b2 = jnp.concatenate([p["m_b2"], p["s_b2"]], axis=0)          # (2L,)

    vec_vals = {
        "e_b1": p["e_b1"], "e_w1_c": p["e_w1"][dim, :], "e_b2": p["e_b2"],
        "hs_b1": hs_b1, "hs_b2": hs_b2,
        "d_b1": p["d_b1"], "d_w1_c": p["d_w1"][L, :],
        "d_b2": p["d_b2"], "d_b3": p["d_b3"],
    }
    vec = jnp.zeros((1, lay["vec_width"]), jnp.float32)
    for name, (c0, w) in lay["vec_off"].items():
        vec = vec.at[0, c0:c0 + w].set(vec_vals[name].reshape(-1))

    w_vals = {
        "e_w1_x": p["e_w1"][:dim, :], "e_w2": p["e_w2"],
        "hs_w1": hs_w1, "hs_w2": hs_w2,
        "d_w1_lat": p["d_w1"][:L, :], "d_w2": p["d_w2"], "d_w3": p["d_w3"],
    }
    wslab = jnp.zeros((lay["w_rows"], lay["w_cols"]), jnp.float32)
    for name, (r0, r, c) in lay["w_off"].items():
        wslab = wslab.at[r0:r0 + r, 0:c].set(w_vals[name])

    return vec, wslab


# ----------------------------------------------------------------------------
# Pallas kernel (closure over the static layout)
# ----------------------------------------------------------------------------
def _make_vae_kernel(dim, L, layout):
    vec_off = layout["vec_off"]
    w_off = layout["w_off"]

    def vrow(vec_ref, name):
        c0, w = vec_off[name]
        return vec_ref[:, c0:c0 + w]                  # (1, w) aligned load

    def wmat(w_ref, name):
        r0, r, c = w_off[name]
        return w_ref[r0:r0 + r, 0:c]                  # (r, c) aligned load

    def kernel(x_ref, c_ref, eps_ref, vec_ref, w_ref, out_ref):
        f32 = jnp.float32
        x = x_ref[...]                                # (TB, dim)
        c = c_ref[...]                                # (TB, 1)
        eps = eps_ref[...]                            # (TB, L)

        # ---- encoder:  relu(concat(x, c) @ W1 + b1)  without the concat ----
        h = (jnp.dot(x, wmat(w_ref, "e_w1_x"), preferred_element_type=f32)
             + c * vrow(vec_ref, "e_w1_c")
             + vrow(vec_ref, "e_b1"))
        h = jnp.maximum(h, 0.0)
        code = jnp.tanh(jnp.dot(h, wmat(w_ref, "e_w2"),
                                preferred_element_type=f32)
                        + vrow(vec_ref, "e_b2"))

        # ---- fused mu / sigma heads (one matmul chain) ----
        hs = jnp.tanh(jnp.dot(code, wmat(w_ref, "hs_w1"),
                              preferred_element_type=f32)
                      + vrow(vec_ref, "hs_b1"))                    # (TB, 4L)
        musig = (jnp.dot(hs, wmat(w_ref, "hs_w2"),
                         preferred_element_type=f32)
                 + vrow(vec_ref, "hs_b2"))                         # (TB, 2L)
        mu = musig[:, :L]
        sigma_log = musig[:, L:2 * L]

        # ---- reparameterization ----
        latent = mu + eps * jnp.exp(sigma_log * 0.5)

        # ---- decoder: first layer split (latent part + condition row) ----
        d1 = (jnp.dot(latent, wmat(w_ref, "d_w1_lat"),
                      preferred_element_type=f32)
              + c * vrow(vec_ref, "d_w1_c")
              + vrow(vec_ref, "d_b1"))
        d1 = jnp.maximum(d1, 0.0)
        d2 = jnp.tanh(jnp.dot(d1, wmat(w_ref, "d_w2"),
                              preferred_element_type=f32)
                      + vrow(vec_ref, "d_b2"))
        recon = (jnp.dot(d2, wmat(w_ref, "d_w3"),
                         preferred_element_type=f32)
                 + vrow(vec_ref, "d_b3"))

        # ---- single lane-dense output slab: [recon | mu | sigma_log] ----
        out_ref[...] = jnp.concatenate([recon, musig], axis=-1)

    return kernel


# ----------------------------------------------------------------------------
# Wrapper
# ----------------------------------------------------------------------------
def _choose_tb(B):
    # Biggest sensible batch tile; sized well inside the 32 MiB scoped VMEM
    # default (and the 64 MiB physical VMEM of v7x) even with 2-deep buffering.
    return max(8, min(512, _round_up(B, 8)))


@jax.jit
def vae_forward(vec_slab, w_slab, x, c, eps):
    """Pallas VAE.forward(x, c) with externally supplied epsilon.

    x:   (B, dim) f32,  c: (B,) or (B, 1) f32,  eps: (B, latent_dim) f32
    Returns (reconstruction, mu, sigma_log).
    """
    if c.ndim == 1:
        c = c[:, None]
    B, dim = x.shape
    L = eps.shape[-1]
    lay = _make_layout(dim, L)

    x = x.astype(jnp.float32)
    c = c.astype(jnp.float32)
    eps = eps.astype(jnp.float32)

    TB = _choose_tb(B)
    Bp = pl.cdiv(B, TB) * TB
    if Bp != B:
        pad = Bp - B
        x = jnp.pad(x, ((0, pad), (0, 0)))
        c = jnp.pad(c, ((0, pad), (0, 0)))
        eps = jnp.pad(eps, ((0, pad), (0, 0)))

    out_w = dim + 2 * L
    kernel = _make_vae_kernel(dim, L, lay)

    out = pl.pallas_call(
        kernel,
        out_shape=jax.ShapeDtypeStruct((Bp, out_w), jnp.float32),
        grid=(Bp // TB,),
        in_specs=[
            pl.BlockSpec((TB, dim), lambda i: (i, 0)),          # x tile
            pl.BlockSpec((TB, 1), lambda i: (i, 0)),            # c tile
            pl.BlockSpec((TB, L), lambda i: (i, 0)),            # eps tile
            pl.BlockSpec((1, lay["vec_width"]), lambda i: (0, 0)),        # biases (resident)
            pl.BlockSpec((lay["w_rows"], lay["w_cols"]), lambda i: (0, 0)),  # weights (resident)
        ],
        out_specs=pl.BlockSpec((TB, out_w), lambda i: (i, 0)),
        compiler_params=pltpu.CompilerParams(
            dimension_semantics=("parallel",)),
    )(x, c, eps, vec_slab, w_slab)

    recon = out[:B, :dim]
    mu = out[:B, dim:dim + L]
    sigma_log = out[:B, dim + L:dim + 2 * L]
    return recon, mu, sigma_log


# ----------------------------------------------------------------------------
# Pure-JAX reference (torch-faithful math, unpacked params) for sanity check
# ----------------------------------------------------------------------------
def vae_forward_ref(p, x, c, eps):
    if c.ndim == 1:
        c = c[:, None]
    xc = jnp.concatenate([x, c], axis=-1)
    h = jnp.maximum(xc @ p["e_w1"] + p["e_b1"], 0.0)
    code = jnp.tanh(h @ p["e_w2"] + p["e_b2"])
    mu = jnp.tanh(code @ p["m_w1"] + p["m_b1"]) @ p["m_w2"] + p["m_b2"]
    sigma_log = jnp.tanh(code @ p["s_w1"] + p["s_b1"]) @ p["s_w2"] + p["s_b2"]
    latent = mu + eps * jnp.exp(sigma_log / 2.0)
    full_code = jnp.concatenate([latent, c], axis=-1)
    d1 = jnp.maximum(full_code @ p["d_w1"] + p["d_b1"], 0.0)
    d2 = jnp.tanh(d1 @ p["d_w2"] + p["d_b2"])
    recon = d2 @ p["d_w3"] + p["d_b3"]
    return recon, mu, sigma_log


if __name__ == "__main__":
    B, DIM, LATENT = 8, 16, 8

    key = jax.random.PRNGKey(0)
    k_params, k_x, k_c, k_eps = jax.random.split(key, 4)

    raw = init_params(k_params, DIM, LATENT)
    vec_slab, w_slab = pack_params(raw, DIM, LATENT)

    x = jax.random.normal(k_x, (B, DIM), jnp.float32)
    c = jax.random.normal(k_c, (B,), jnp.float32)       # 1-D condition (torch path)
    # TODO(synk): torch.randn_like epsilon is sampled host-side and passed in
    # (keeps the kernel deterministic and comparable to the reference).
    eps = jax.random.normal(k_eps, (B, LATENT), jnp.float32)

    recon, mu, sigma_log = vae_forward(vec_slab, w_slab, x, c, eps)
    jax.block_until_ready((recon, mu, sigma_log))

    r_ref, m_ref, s_ref = vae_forward_ref(raw, x, c, eps)
    assert recon.shape == (B, DIM) and mu.shape == (B, LATENT) and sigma_log.shape == (B, LATENT)
    assert jnp.allclose(recon, r_ref, atol=1e-5, rtol=1e-5)
    assert jnp.allclose(mu, m_ref, atol=1e-5, rtol=1e-5)
    assert jnp.allclose(sigma_log, s_ref, atol=1e-5, rtol=1e-5)

    print("KERNEL_OK")
</pallas_src>

<mosaic_0001>
module attributes {stable_mosaic.version = 11 : i64} {
  func.func @kernel(%arg0: i32, %arg1: memref<8x16xf32, #tpu.memory_space<vmem>>, %arg2: memref<8x1xf32, #tpu.memory_space<vmem>>, %arg3: memref<8x8xf32, #tpu.memory_space<vmem>>, %arg4: memref<1x1408xf32, #tpu.memory_space<vmem>>, %arg5: memref<376x256xf32, #tpu.memory_space<vmem>>, %arg6: memref<8x32xf32, #tpu.memory_space<vmem>>) attributes {dimension_semantics = [#tpu.dimension_semantics<parallel>], iteration_bounds = array<i64: 1>, scalar_prefetch = 0 : i64, scratch_operands = 0 : i64, tpu.core_type = #tpu.core_type<tc>, window_params = [{transform_indices = @transform_0, window_bounds = array<i64: 8, 16>}, {transform_indices = @transform_1, window_bounds = array<i64: 8, 1>}, {transform_indices = @transform_2, window_bounds = array<i64: 8, 8>}, {pipeline_mode = #tpu.pipeline_mode<synchronous>, transform_indices = @transform_3, window_bounds = array<i64: 1, 1408>}, {pipeline_mode = #tpu.pipeline_mode<synchronous>, transform_indices = @transform_4, window_bounds = array<i64: 376, 256>}, {transform_indices = @transform_5, window_bounds = array<i64: 8, 32>}]} {
    %c0 = arith.constant 0 : index
    %c0_0 = arith.constant 0 : index
    %0 = vector.load %arg1[%c0, %c0_0] : memref<8x16xf32, #tpu.memory_space<vmem>>, vector<8x16xf32>
    %c0_1 = arith.constant 0 : index
    %c0_2 = arith.constant 0 : index
    %1 = vector.load %arg2[%c0_1, %c0_2] : memref<8x1xf32, #tpu.memory_space<vmem>>, vector<8x1xf32>
    %c0_3 = arith.constant 0 : index
    %c0_4 = arith.constant 0 : index
    %2 = vector.load %arg3[%c0_3, %c0_4] : memref<8x8xf32, #tpu.memory_space<vmem>>, vector<8x8xf32>
    %c0_5 = arith.constant 0 : index
    %c0_6 = arith.constant 0 : index
    %3 = vector.load %arg5[%c0_5, %c0_6] : memref<376x256xf32, #tpu.memory_space<vmem>>, vector<16x170xf32>
    %cst = arith.constant dense<0.000000e+00> : vector<8x170xf32>
    %4 = tpu.matmul %0, %3, %cst {dimension_numbers = #tpu.dot_dimension_numbers<[1], [0], [0], [1], [0, 0, 1, 1], [], []>} : vector<8x16xf32>, vector<16x170xf32>, vector<8x170xf32> -> vector<8x170xf32>
    %c0_7 = arith.constant 0 : index
    %c256 = arith.constant 256 : index
    %5 = vector.load %arg4[%c0_7, %c256] : memref<1x1408xf32, #tpu.memory_space<vmem>>, vector<1x170xf32>
    %6 = vector.broadcast %1 : vector<8x1xf32> to vector<8x170xf32>
    %7 = vector.broadcast %5 : vector<1x170xf32> to vector<8x170xf32>
    %8 = arith.mulf %6, %7 : vector<8x170xf32>
    %9 = arith.addf %4, %8 : vector<8x170xf32>
    %c0_8 = arith.constant 0 : index
    %c0_9 = arith.constant 0 : index
    %10 = vector.load %arg4[%c0_8, %c0_9] : memref<1x1408xf32, #tpu.memory_space<vmem>>, vector<1x170xf32>
    %11 = vector.broadcast %10 : vector<1x170xf32> to vector<8x170xf32>
    %12 = arith.addf %9, %11 : vector<8x170xf32>
    %cst_10 = arith.constant 0.000000e+00 : f32
    %13 = vector.broadcast %cst_10 : f32 to vector<8x170xf32>
    %14 = arith.maximumf %12, %13 : vector<8x170xf32>
    %c16 = arith.constant 16 : index
    %c0_11 = arith.constant 0 : index
    %15 = vector.load %arg5[%c16, %c0_11] : memref<376x256xf32, #tpu.memory_space<vmem>>, vector<170x8xf32>
    %cst_12 = arith.constant dense<0.000000e+00> : vector<8x8xf32>
    %16 = tpu.matmul %14, %15, %cst_12 {dimension_numbers = #tpu.dot_dimension_numbers<[1], [0], [0], [1], [0, 0, 1, 1], [], []>} : vector<8x170xf32>, vector<170x8xf32>, vector<8x8xf32> -> vector<8x8xf32>
    %c0_13 = arith.constant 0 : index
    %c512 = arith.constant 512 : index
    %17 = vector.load %arg4[%c0_13, %c512] : memref<1x1408xf32, #tpu.memory_space<vmem>>, vector<1x8xf32>
    %18 = vector.broadcast %17 : vector<1x8xf32> to vector<8x8xf32>
    %19 = arith.addf %16, %18 : vector<8x8xf32>
    %20 = math.tanh %19 : vector<8x8xf32>
    %c192 = arith.constant 192 : index
    %c0_14 = arith.constant 0 : index
    %21 = vector.load %arg5[%c192, %c0_14] : memref<376x256xf32, #tpu.memory_space<vmem>>, vector<8x32xf32>
    %cst_15 = arith.constant dense<0.000000e+00> : vector<8x32xf32>
    %22 = tpu.matmul %20, %21, %cst_15 {dimension_numbers = #tpu.dot_dimension_numbers<[1], [0], [0], [1], [0, 0, 1, 1], [], []>} : vector<8x8xf32>, vector<8x32xf32>, vector<8x32xf32> -> vector<8x32xf32>
    %c0_16 = arith.constant 0 : index
    %c640 = arith.constant 640 : index
    %23 = vector.load %arg4[%c0_16, %c640] : memref<1x1408xf32, #tpu.memory_space<vmem>>, vector<1x32xf32>
    %24 = vector.broadcast %23 : vector<1x32xf32> to vector<8x32xf32>
    %25 = arith.addf %22, %24 : vector<8x32xf32>
    %26 = math.tanh %25 : vector<8x32xf32>
    %c200 = arith.constant 200 : index
    %c0_17 = arith.constant 0 : index
    %27 = vector.load %arg5[%c200, %c0_17] : memref<376x256xf32, #tpu.memory_space<vmem>>, vector<32x16xf32>
    %cst_18 = arith.constant dense<0.000000e+00> : vector<8x16xf32>
    %28 = tpu.matmul %26, %27, %cst_18 {dimension_numbers = #tpu.dot_dimension_numbers<[1], [0], [0], [1], [0, 0, 1, 1], [], []>} : vector<8x32xf32>, vector<32x16xf32>, vector<8x16xf32> -> vector<8x16xf32>
    %c0_19 = arith.constant 0 : index
    %c768 = arith.constant 768 : index
    %29 = vector.load %arg4[%c0_19, %c768] : memref<1x1408xf32, #tpu.memory_space<vmem>>, vector<1x16xf32>
    %30 = vector.broadcast %29 : vector<1x16xf32> to vector<8x16xf32>
    %31 = arith.addf %28, %30 : vector<8x16xf32>
    %32 = vector.extract_strided_slice %31 {offsets = [0, 0], sizes = [8, 8], strides = [1, 1]} : vector<8x16xf32> to vector<8x8xf32>
    %33 = vector.extract_strided_slice %31 {offsets = [0, 8], sizes = [8, 8], strides = [1, 1]} : vector<8x16xf32> to vector<8x8xf32>
    %cst_20 = arith.constant 5.000000e-01 : f32
    %34 = vector.broadcast %cst_20 : f32 to vector<8x8xf32>
    %35 = arith.mulf %33, %34 : vector<8x8xf32>
    %36 = math.exp %35 : vector<8x8xf32>
    %37 = arith.mulf %2, %36 : vector<8x8xf32>
    %38 = arith.addf %32, %37 : vector<8x8xf32>
    %c232 = arith.constant 232 : index
    %c0_21 = arith.constant 0 : index
    %39 = vector.load %arg5[%c232, %c0_21] : memref<376x256xf32, #tpu.memory_space<vmem>>, vector<8x90xf32>
    %cst_22 = arith.constant dense<0.000000e+00> : vector<8x90xf32>
    %40 = tpu.matmul %38, %39, %cst_22 {dimension_numbers = #tpu.dot_dimension_numbers<[1], [0], [0], [1], [0, 0, 1, 1], [], []>} : vector<8x8xf32>, vector<8x90xf32>, vector<8x90xf32> -> vector<8x90xf32>
    %c0_23 = arith.constant 0 : index
    %c1024 = arith.constant 1024 : index
    %41 = vector.load %arg4[%c0_23, %c1024] : memref<1x1408xf32, #tpu.memory_space<vmem>>, vector<1x90xf32>
    %42 = vector.broadcast %1 : vector<8x1xf32> to vector<8x90xf32>
    %43 = vector.broadcast %41 : vector<1x90xf32> to vector<8x90xf32>
    %44 = arith.mulf %42, %43 : vector<8x90xf32>
    %45 = arith.addf %40, %44 : vector<8x90xf32>
    %c0_24 = arith.constant 0 : index
    %c896 = arith.constant 896 : index
    %46 = vector.load %arg4[%c0_24, %c896] : memref<1x1408xf32, #tpu.memory_space<vmem>>, vector<1x90xf32>
    %47 = vector.broadcast %46 : vector<1x90xf32> to vector<8x90xf32>
    %48 = arith.addf %45, %47 : vector<8x90xf32>
    %cst_25 = arith.constant 0.000000e+00 : f32
    %49 = vector.broadcast %cst_25 : f32 to vector<8x90xf32>
    %50 = arith.maximumf %48, %49 : vector<8x90xf32>
    %c240 = arith.constant 240 : index
    %c0_26 = arith.constant 0 : index
    %51 = vector.load %arg5[%c240, %c0_26] : memref<376x256xf32, #tpu.memory_space<vmem>>, vector<90x36xf32>
    %cst_27 = arith.constant dense<0.000000e+00> : vector<8x36xf32>
    %52 = tpu.matmul %50, %51, %cst_27 {dimension_numbers = #tpu.dot_dimension_numbers<[1], [0], [0], [1], [0, 0, 1, 1], [], []>} : vector<8x90xf32>, vector<90x36xf32>, vector<8x36xf32> -> vector<8x36xf32>
    %c0_28 = arith.constant 0 : index
    %c1152 = arith.constant 1152 : index
    %53 = vector.load %arg4[%c0_28, %c1152] : memref<1x1408xf32, #tpu.memory_space<vmem>>, vector<1x36xf32>
    %54 = vector.broadcast %53 : vector<1x36xf32> to vector<8x36xf32>
    %55 = arith.addf %52, %54 : vector<8x36xf32>
    %56 = math.tanh %55 : vector<8x36xf32>
    %c336 = arith.constant 336 : index
    %c0_29 = arith.constant 0 : index
    %57 = vector.load %arg5[%c336, %c0_29] : memref<376x256xf32, #tpu.memory_space<vmem>>, vector<36x16xf32>
    %cst_30 = arith.constant dense<0.000000e+00> : vector<8x16xf32>
    %58 = tpu.matmul %56, %57, %cst_30 {dimension_numbers = #tpu.dot_dimension_numbers<[1], [0], [0], [1], [0, 0, 1, 1], [], []>} : vector<8x36xf32>, vector<36x16xf32>, vector<8x16xf32> -> vector<8x16xf32>
    %c0_31 = arith.constant 0 : index
    %c1280 = arith.constant 1280 : index
    %59 = vector.load %arg4[%c0_31, %c1280] : memref<1x1408xf32, #tpu.memory_space<vmem>>, vector<1x16xf32>
    %60 = vector.broadcast %59 : vector<1x16xf32> to vector<8x16xf32>
    %61 = arith.addf %58, %60 : vector<8x16xf32>
    %62 = tpu.concatenate %61, %31 in 1 : vector<8x16xf32>, vector<8x16xf32> -> vector<8x32xf32>
    %c0_32 = arith.constant 0 : index
    %c0_33 = arith.constant 0 : index
    %63 = vector.load %arg6[%c0_32, %c0_33] : memref<8x32xf32, #tpu.memory_space<vmem>>, vector<8x32xf32>
    tpu.vector_store %arg6[%c0_32, %c0_33], %62 {strides = array<i32>} : memref<8x32xf32, #tpu.memory_space<vmem>>, vector<8x32xf32>,
    return
  }
  func.func @transform_0(%arg0: i32) -> (i32, i32) {
    %c0_i32 = arith.constant 0 : i32
    %c0_i32_0 = arith.constant 0 : i32
    return %arg0, %c0_i32 : i32, i32
  }
  func.func @transform_1(%arg0: i32) -> (i32, i32) {
    %c0_i32 = arith.constant 0 : i32
    %c0_i32_0 = arith.constant 0 : i32
    return %arg0, %c0_i32 : i32, i32
  }
  func.func @transform_2(%arg0: i32) -> (i32, i32) {
    %c0_i32 = arith.constant 0 : i32
    %c0_i32_0 = arith.constant 0 : i32
    return %arg0, %c0_i32 : i32, i32
  }
  func.func @transform_3(%arg0: i32) -> (i32, i32) {
    %c0_i32 = arith.constant 0 : i32
    %c0_i32_0 = arith.constant 0 : i32
    %c0_i32_1 = arith.constant 0 : i32
    return %c0_i32, %c0_i32_0 : i32, i32
  }
  func.func @transform_4(%arg0: i32) -> (i32, i32) {
    %c0_i32 = arith.constant 0 : i32
    %c0_i32_0 = arith.constant 0 : i32
    %c0_i32_1 = arith.constant 0 : i32
    return %c0_i32, %c0_i32_0 : i32, i32
  }
  func.func @transform_5(%arg0: i32) -> (i32, i32) {
    %c0_i32 = arith.constant 0 : i32
    %c0_i32_0 = arith.constant 0 : i32
    return %arg0, %c0_i32 : i32, i32
  }
}

</mosaic_0001>

<llo_original>
// kernel: vae_forward.1
$region0: #{vae_forward.1}
  #allocation0 [shape = 'u32[]', space=smem, size = 0x4, offset = 0x4, fixed_abs, tag = 'smem constant byte address 0x4 - core index']
  #allocation1 [shape = 'u32[144,128]{1,0:T(1,128)}', space=vmem, size = 0x12000, scoped, tag = 'internal scratch']
  %s0 = inlined_call_operand.vmem [shape: f32[8,16], index: 0, kind: input, shape index: {}]
  %s1 = inlined_call_operand.vmem [shape: f32[8,1], index: 1, kind: input, shape index: {}]
  %s2 = inlined_call_operand.vmem [shape: f32[8,8], index: 2, kind: input, shape index: {}]
  %s3 = inlined_call_operand.hbm [shape: f32[1,1408], index: 3, kind: input, shape index: {}]
  %s4 = inlined_call_operand.hbm [shape: f32[376,256], index: 4, kind: input, shape index: {}]
  %s5 = inlined_call_operand.vmem [shape: f32[8,32], index: 5, kind: output, shape index: {}]
  %s6 = sld [smem:[#allocation0]]
  $region38: #{vae_forward.1} parent=0
    _
  %s8 = ssub.s32 1, %s6
  %s9 = scalar_select 0, %s8, %s6
  $region1: #{vae_forward.1} parent=0
    #allocation2 [shape = 'u8[5632]{0}', space=vmem, size = 0x1800, scoped, tag = 'input window, operand 3, single buffered']
    #allocation3 [shape = 's32[1]{0}', space=sflag, size = 0x4, scoped, tag = 'scoped memory for vae_forward.1']
    #allocation4 [shape = 'u8[385024]{0}', space=vmem, size = 0x5e000, scoped, tag = 'input window, operand 4, single buffered']
    #allocation5 [shape = 's32[1]{0}', space=sflag, size = 0x4, scoped, tag = 'scoped memory for vae_forward.1']
    %10 = vsyncpa [#allocation3], 0
    %11 = vsyncpa [#allocation5], 0
    // Predicated region
    $region2: #{vae_forward.1} parent=1 // pred_check
      _
    $region3: #{vae_forward.1} parent=1 // pred_check_branch
      %13 = sbr.rel (0) target = $region5
    $region4: #{vae_forward.1} parent=1 // pred_region
      _
    $region5: #{vae_forward.1} parent=1 // pred_fallthru
      _
    // Predicated region
    $region6: #{vae_forward.1} parent=1 // pred_check
      _
    $region7: #{vae_forward.1} parent=1 // pred_check_branch
      %15 = sbr.rel (0) target = $region9
    $region8: #{vae_forward.1} parent=1 // pred_region
      _
    $region9: #{vae_forward.1} parent=1 // pred_fallthru
      _
    // Predicated region
    $region10: #{vae_forward.1} parent=1 // pred_check
      _
    $region11: #{vae_forward.1} parent=1 // pred_check_branch
      %17 = sbr.rel (0) target = $region13
    $region12: #{vae_forward.1} parent=1 // pred_region
      _
    $region13: #{vae_forward.1} parent=1 // pred_fallthru
      _
    // Predicated region
    $region14: #{vae_forward.1} parent=1 // pred_check
      _
    $region15: #{vae_forward.1} parent=1 // pred_check_branch
      %19 = sbr.rel (0) target = $region17
    $region16: #{vae_forward.1} parent=1 // pred_region
      %s21 = ssub.s32 176, 176
      %22 = vsyncadd [#allocation3], %s21
      %s24 = sshll.u32 [#allocation2], 4
      %s25 = int_to_ptr.vmem [resolvable:$true] %s24
      %27 = dma.hbm_to_vmem [thread:$0]  %s3, 176, %s25, [#allocation3]
    $region17: #{vae_forward.1} parent=1 // pred_fallthru
      _
    // Predicated region
    $region18: #{vae_forward.1} parent=1 // pred_check
      _
    $region19: #{vae_forward.1} parent=1 // pred_check_branch
      %29 = sbr.rel (0) target = $region21
    $region20: #{vae_forward.1} parent=1 // pred_region
      %s31 = ssub.s32 12032, 12032
      %32 = vsyncadd [#allocation5], %s31
      %s33 = sshll.u32 [#allocation4], 4
      %s34 = int_to_ptr.vmem [resolvable:$true] %s33
      %39 = dma.hbm_to_vmem [thread:$0]  %s4, 12032, %s34, [#allocation5], 256, 256, 16
    $region21: #{vae_forward.1} parent=1 // pred_fallthru
      _
    // Predicated region
    $region22: #{vae_forward.1} parent=1 // pred_check
      _
    $region23: #{vae_forward.1} parent=1 // pred_check_branch
      %41 = sbr.rel (0) target = $region25
    $region24: #{vae_forward.1} parent=1 // pred_region
      %42 = dma.done [#allocation3], 176
    $region25: #{vae_forward.1} parent=1 // pred_fallthru
      _
    // Predicated region
    $region26: #{vae_forward.1} parent=1 // pred_check
      _
    $region27: #{vae_forward.1} parent=1 // pred_check_branch
      %44 = sbr.rel (0) target = $region29
    $region28: #{vae_forward.1} parent=1 // pred_region
      %45 = dma.done [#allocation5], 12032
    $region29: #{vae_forward.1} parent=1 // pred_fallthru
      _
    %v46 = vld [vmem:[%s0] sm:$0xff]
    %v47 = vld [vmem:[%s1] sm:$0xff]
    %v48 = vld [vmem:[%s2] sm:$0xff]
    %v49 = vld [vmem:[#allocation4] sm:$0xff]
    %v50 = vld [vmem:[#allocation4 + $0x8] sm:$0xff]
    %v51 = vld [vmem:[#allocation4 + $0x10] sm:$0xff]
    %v52 = vld [vmem:[#allocation4 + $0x18] sm:$0xff]
    %v53 = vld [vmem:[#allocation2 + $0x2] sm:$0x3]
    %55 = vset.pattern.permute.xlu0 0
    %56 = vperm.xlu0 %55, %v47
    %v57 = vpop.permute.xlu0 %56
    %v60 = vlaneseq
    %v61 = vshrl.u32 %v60, 7
    %v62 = vsub.s32 0, %v61
    %v63 = vrot.slane %v53, %v62
    %v64 = vlaneseq
    %v65 = vshrl.u32 %v64, 7
    %v66 = vsub.s32 1, %v65
    %v67 = vrot.slane %v53, %v66
    %v70 = vmul.f32 %v57, %v63
    %v71 = vmul.f32 %v57, %v67
    %vm72 = vcmask 130048
    %v74 = vsel %vm72, %v46, 0
    %76 = vmatprep.subr.mxu0 0.0
    %77 = vmatpush1.msra.mxu0 0.0
    %78 = vmatprep.subr.mxu0 0.0
    %79 = vmatpush1.msra.mxu0 0.0
    %80 = vmatprep.subr.mxu0 0.0
    %81 = vmatpush1.msra.mxu0 0.0
    %82 = vmatprep.subr.mxu0 0.0
    %83 = vmatpush1.msra.mxu0 0.0
    %84 = vmatprep.subr.mxu0 0.0
    %85 = vmatpush1.msra.mxu0 0.0
    %86 = vmatprep.subr.mxu0 0.0
    %87 = vmatpush1.msra.mxu0 0.0
    %88 = vmatprep.subr.mxu0 0.0
    %89 = vmatpush1.msra.mxu0 0.0
    %90 = vmatprep.subr.mxu0 0.0
    %91 = vmatpush1.msra.mxu0 0.0
    %92 = vmatprep.subr.mxu0 0.0
    %93 = vmatpush1.msra.mxu0 0.0
    %94 = vmatprep.subr.mxu0 0.0
    %95 = vmatpush1.msra.mxu0 0.0
    %96 = vmatprep.subr.mxu0 0.0
    %97 = vmatpush1.msra.mxu0 0.0
    %98 = vmatprep.subr.mxu0 0.0
    %99 = vmatpush1.msra.mxu0 0.0
    %100 = vmatprep.subr.mxu0 0.0
    %101 = vmatpush1.msra.mxu0 0.0
    %102 = vmatprep.subr.mxu0 0.0
    %103 = vmatpush1.msra.mxu0 0.0
    %104 = vmatprep.subr.mxu0 %v52
    %105 = vmatpush1.msra.mxu0 %v51
    %106 = vmatprep.subr.mxu0 %v50
    %107 = vmatpush1.msra.mxu0 %v49
    %108 = vmatprep.subr.mxu0 0.0
    %109 = vmatpush2.msra.mxu0 0.0
    %110 = vmatprep.subr.mxu0 0.0
    %111 = vmatpush2.msra.mxu0 0.0
    %112 = vmatprep.subr.mxu0 0.0
    %113 = vmatpush2.msra.mxu0 0.0
    %114 = vmatprep.subr.mxu0 0.0
    %115 = vmatpush2.msra.mxu0 0.0
    %116 = vmatprep.subr.mxu0 0.0
    %117 = vmatpush2.msra.mxu0 0.0
    %118 = vmatprep.subr.mxu0 0.0
    %119 = vmatpush2.msra.mxu0 0.0
    %120 = vmatprep.subr.mxu0 0.0
    %121 = vmatpush2.msra.mxu0 0.0
    %122 = vmatprep.subr.mxu0 0.0
    %123 = vmatpush2.msra.mxu0 0.0
    %124 = vmatprep.subr.mxu0 0.0
    %125 = vmatpush2.msra.mxu0 0.0
    %126 = vmatprep.subr.mxu0 0.0
    %127 = vmatpush2.msra.mxu0 0.0
    %128 = vmatprep.subr.mxu0 0.0
    %129 = vmatpush2.msra.mxu0 0.0
    %130 = vmatprep.subr.mxu0 0.0
    %131 = vmatpush2.msra.mxu0 0.0
    %132 = vmatprep.subr.mxu0 0.0
    %133 = vmatpush2.msra.mxu0 0.0
    %134 = vmatprep.subr.mxu0 0.0
    %135 = vmatpush2.msra.mxu0 0.0
    %136 = vmatprep.subr.mxu0 0.0
    %137 = vmatpush2.msra.mxu0 0.0
    %138 = vmatprep.subr.mxu0 0.0
    %139 = vmatpush2.msra.mxu0 0.0
    %140 = vmatprep.mubr.f32.mxu0 0.0
    %141 = vmatmul.mubr.f32.gmra.mxu0 %v74
    %v142 = vpop.f32.mrf.mxu0
    %v143 = vadd.f32 %v70, %v142
    %v144 = vpop.f32.mrf.mxu0
    %v145 = vadd.f32 %v71, %v144
    %146 = vdwg.mxu0
    %v147 = vld [vmem:[#allocation2] sm:$0x3]
    %v149 = vlaneseq
    %v150 = vshrl.u32 %v149, 7
    %v151 = vsub.s32 0, %v150
    %v152 = vrot.slane %v147, %v151
    %v153 = vlaneseq
    %v154 = vshrl.u32 %v153, 7
    %v155 = vsub.s32 1, %v154
    %v156 = vrot.slane %v147, %v155
    %v159 = vadd.f32 %v143, %v152
    %v160 = vadd.f32 %v145, %v156
    %v161 = vmax.f32 %v159, 0.0
    %v162 = vmax.f32 %v160, 0.0
    %v163 = vld [vmem:[#allocation4 + $0x20] sm:$0xff]
    %v164 = vld [vmem:[#allocation4 + $0x30] sm:$0xff]
    %v165 = vld [vmem:[#allocation4 + $0x40] sm:$0xff]
    %v166 = vld [vmem:[#allocation4 + $0x50] sm:$0xff]
    %v167 = vld [vmem:[#allocation4 + $0x60] sm:$0xff]
    %v168 = vld [vmem:[#allocation4 + $0x70] sm:$0xff]
    %v169 = vld [vmem:[#allocation4 + $0x80] sm:$0xff]
    %v170 = vld [vmem:[#allocation4 + $0x90] sm:$0xff]
    %v171 = vld [vmem:[#allocation4 + $0xa0] sm:$0xff]
    %v172 = vld [vmem:[#allocation4 + $0xb0] sm:$0xff]
    %v173 = vld [vmem:[#allocation4 + $0xc0] sm:$0xff]
    %v174 = vld [vmem:[#allocation4 + $0xd0] sm:$0xff]
    %v175 = vld [vmem:[#allocation4 + $0xe0] sm:$0xff]
    %v176 = vld [vmem:[#allocation4 + $0xf0] sm:$0xff]
    %v177 = vld [vmem:[#allocation4 + $0x100] sm:$0xff]
    %v178 = vld [vmem:[#allocation4 + $0x110] sm:$0xff]
    %v179 = vld [vmem:[#allocation4 + $0x120] sm:$0xff]
    %v180 = vld [vmem:[#allocation4 + $0x130] sm:$0xff]
    %v181 = vld [vmem:[#allocation4 + $0x140] sm:$0xff]
    %v182 = vld [vmem:[#allocation4 + $0x150] sm:$0xff]
    %v183 = vld [vmem:[#allocation4 + $0x160] sm:$0xff]
    %v184 = vld [vmem:[#allocation4 + $0x170] sm:$0x3]
    %v185 = vld [vmem:[#allocation2 + $0x4] sm:$0x1]
    %v187 = vlaneseq
    %v188 = vshrl.u32 %v187, 7
    %v189 = vsub.s32 0, %v188
    %v190 = vrot.slane %v185, %v189
    %vm192 = vcmask 343040
    %v194 = vsel %vm192, %v162, 0
    %vm196 = vcmask 1041408
    %v198 = vsel %vm196, %v184, 0
    %200 = vmatprep.subr.mxu0 0.0
    %201 = vmatpush1.msra.mxu0 %v178
    %202 = vmatprep.subr.mxu0 0.0
    %203 = vmatpush1.msra.mxu0 %v177
    %204 = vmatprep.subr.mxu0 0.0
    %205 = vmatpush1.msra.mxu0 %v176
    %206 = vmatprep.subr.mxu0 0.0
    %207 = vmatpush1.msra.mxu0 %v175
    %208 = vmatprep.subr.mxu0 0.0
    %209 = vmatpush1.msra.mxu0 %v174
    %210 = vmatprep.subr.mxu0 0.0
    %211 = vmatpush1.msra.mxu0 %v173
    %212 = vmatprep.subr.mxu0 0.0
    %213 = vmatpush1.msra.mxu0 %v172
    %214 = vmatprep.subr.mxu0 0.0
    %215 = vmatpush1.msra.mxu0 %v171
    %216 = vmatprep.subr.mxu0 0.0
    %217 = vmatpush1.msra.mxu0 %v170
    %218 = vmatprep.subr.mxu0 0.0
    %219 = vmatpush1.msra.mxu0 %v169
    %220 = vmatprep.subr.mxu0 0.0
    %221 = vmatpush1.msra.mxu0 %v168
    %222 = vmatprep.subr.mxu0 0.0
    %223 = vmatpush1.msra.mxu0 %v167
    %224 = vmatprep.subr.mxu0 0.0
    %225 = vmatpush1.msra.mxu0 %v166
    %226 = vmatprep.subr.mxu0 0.0
    %227 = vmatpush1.msra.mxu0 %v165
    %228 = vmatprep.subr.mxu0 0.0
    %229 = vmatpush1.msra.mxu0 %v164
    %230 = vmatprep.subr.mxu0 0.0
    %231 = vmatpush1.msra.mxu0 %v163
    %232 = vmatprep.subr.mxu0 0.0
    %233 = vmatpush2.msra.mxu0 0.0
    %234 = vmatprep.subr.mxu0 0.0
    %235 = vmatpush2.msra.mxu0 0.0
    %236 = vmatprep.subr.mxu0 0.0
    %237 = vmatpush2.msra.mxu0 0.0
    %238 = vmatprep.subr.mxu0 0.0
    %239 = vmatpush2.msra.mxu0 0.0
    %240 = vmatprep.subr.mxu0 0.0
    %241 = vmatpush2.msra.mxu0 0.0
    %242 = vmatprep.subr.mxu0 0.0
    %243 = vmatpush2.msra.mxu0 0.0
    %244 = vmatprep.subr.mxu0 0.0
    %245 = vmatpush2.msra.mxu0 0.0
    %246 = vmatprep.subr.mxu0 0.0
    %247 = vmatpush2.msra.mxu0 0.0
    %248 = vmatprep.subr.mxu0 0.0
    %249 = vmatpush2.msra.mxu0 0.0
    %250 = vmatprep.subr.mxu0 0.0
    %251 = vmatpush2.msra.mxu0 0.0
    %252 = vmatprep.subr.mxu0 0.0
    %253 = vmatpush2.msra.mxu0 %v198
    %254 = vmatprep.subr.mxu0 0.0
    %255 = vmatpush2.msra.mxu0 %v183
    %256 = vmatprep.subr.mxu0 0.0
    %257 = vmatpush2.msra.mxu0 %v182
    %258 = vmatprep.subr.mxu0 0.0
    %259 = vmatpush2.msra.mxu0 %v181
    %260 = vmatprep.subr.mxu0 0.0
    %261 = vmatpush2.msra.mxu0 %v180
    %262 = vmatprep.subr.mxu0 0.0
    %263 = vmatpush2.msra.mxu0 %v179
    %264 = vmatprep.mubr.f32.mxu0 %v194
    %265 = vmatmul.mubr.f32.gmra.mxu0 %v161
    %v266 = vpop.f32.mrf.mxu0
    %v267 = vadd.f32 %v190, %v266
    %v268 = vpop.f32.mrf.mxu0
    %269 = vdwg.mxu0
    %v270 = vtanh.pop %v267
    %v271 = vld [vmem:[#allocation4 + $0x180] sm:$0xff]
    %v272 = vld [vmem:[#allocation2 + $0x5] sm:$0x1]
    %v274 = vlaneseq
    %v275 = vshrl.u32 %v274, 7
    %v276 = vsub.s32 0, %v275
    %v277 = vrot.slane %v272, %v276
    %vm279 = vcmask 64512
    %v281 = vsel %vm279, %v270, 0
    %283 = vmatprep.subr.mxu0 0.0
    %284 = vmatpush1.msra.mxu0 0.0
    %285 = vmatprep.subr.mxu0 0.0
    %286 = vmatpush1.msra.mxu0 0.0
    %287 = vmatprep.subr.mxu0 0.0
    %288 = vmatpush1.msra.mxu0 0.0
    %289 = vmatprep.subr.mxu0 0.0
    %290 = vmatpush1.msra.mxu0 0.0
    %291 = vmatprep.subr.mxu0 0.0
    %292 = vmatpush1.msra.mxu0 0.0
    %293 = vmatprep.subr.mxu0 0.0
    %294 = vmatpush1.msra.mxu0 0.0
    %295 = vmatprep.subr.mxu0 0.0
    %296 = vmatpush1.msra.mxu0 0.0
    %297 = vmatprep.subr.mxu0 0.0
    %298 = vmatpush1.msra.mxu0 0.0
    %299 = vmatprep.subr.mxu0 0.0
    %300 = vmatpush1.msra.mxu0 0.0
    %301 = vmatprep.subr.mxu0 0.0
    %302 = vmatpush1.msra.mxu0 0.0
    %303 = vmatprep.subr.mxu0 0.0
    %304 = vmatpush1.msra.mxu0 0.0
    %305 = vmatprep.subr.mxu0 0.0
    %306 = vmatpush1.msra.mxu0 0.0
    %307 = vmatprep.subr.mxu0 0.0
    %308 = vmatpush1.msra.mxu0 0.0
    %309 = vmatprep.subr.mxu0 0.0
    %310 = vmatpush1.msra.mxu0 0.0
    %311 = vmatprep.subr.mxu0 0.0
    %312 = vmatpush1.msra.mxu0 0.0
    %313 = vmatprep.subr.mxu0 0.0
    %314 = vmatpush1.msra.mxu0 %v271
    %315 = vmatprep.subr.mxu0 0.0
    %316 = vmatpush2.msra.mxu0 0.0
    %317 = vmatprep.subr.mxu0 0.0
    %318 = vmatpush2.msra.mxu0 0.0
    %319 = vmatprep.subr.mxu0 0.0
    %320 = vmatpush2.msra.mxu0 0.0
    %321 = vmatprep.subr.mxu0 0.0
    %322 = vmatpush2.msra.mxu0 0.0
    %323 = vmatprep.subr.mxu0 0.0
    %324 = vmatpush2.msra.mxu0 0.0
    %325 = vmatprep.subr.mxu0 0.0
    %326 = vmatpush2.msra.mxu0 0.0
    %327 = vmatprep.subr.mxu0 0.0
    %328 = vmatpush2.msra.mxu0 0.0
    %329 = vmatprep.subr.mxu0 0.0
    %330 = vmatpush2.msra.mxu0 0.0
    %331 = vmatprep.subr.mxu0 0.0
    %332 = vmatpush2.msra.mxu0 0.0
    %333 = vmatprep.subr.mxu0 0.0
    %334 = vmatpush2.msra.mxu0 0.0
    %335 = vmatprep.subr.mxu0 0.0
    %336 = vmatpush2.msra.mxu0 0.0
    %337 = vmatprep.subr.mxu0 0.0
    %338 = vmatpush2.msra.mxu0 0.0
    %339 = vmatprep.subr.mxu0 0.0
    %340 = vmatpush2.msra.mxu0 0.0
    %341 = vmatprep.subr.mxu0 0.0
    %342 = vmatpush2.msra.mxu0 0.0
    %343 = vmatprep.subr.mxu0 0.0
    %344 = vmatpush2.msra.mxu0 0.0
    %345 = vmatprep.subr.mxu0 0.0
    %346 = vmatpush2.msra.mxu0 0.0
    %347 = vmatprep.mubr.f32.mxu0 0.0
    %348 = vmatmul.mubr.f32.gmra.mxu0 %v281
    %v349 = vpop.f32.mrf.mxu0
    %v350 = vadd.f32 %v277, %v349
    %v351 = vpop.f32.mrf.mxu0
    %352 = vdwg.mxu0
    %v353 = vtanh.pop %v350
    %v354 = vld [vmem:[#allocation4 + $0x190] sm:$0xff]
    %v355 = vld [vmem:[#allocation4 + $0x1a0] sm:$0xff]
    %v356 = vld [vmem:[#allocation4 + $0x1b0] sm:$0xff]
    %v357 = vld [vmem:[#allocation4 + $0x1c0] sm:$0xff]
    %v358 = vld [vmem:[#allocation2 + $0x6] sm:$0x1]
    %v360 = vlaneseq
    %v361 = vshrl.u32 %v360, 7
    %v362 = vsub.s32 0, %v361
    %v363 = vrot.slane %v358, %v362
    %vm365 = vcmask 261120
    %v367 = vsel %vm365, %v353, 0
    %369 = vmatprep.subr.mxu0 0.0
    %370 = vmatpush1.msra.mxu0 0.0
    %371 = vmatprep.subr.mxu0 0.0
    %372 = vmatpush1.msra.mxu0 0.0
    %373 = vmatprep.subr.mxu0 0.0
    %374 = vmatpush1.msra.mxu0 0.0
    %375 = vmatprep.subr.mxu0 0.0
    %376 = vmatpush1.msra.mxu0 0.0
    %377 = vmatprep.subr.mxu0 0.0
    %378 = vmatpush1.msra.mxu0 0.0
    %379 = vmatprep.subr.mxu0 0.0
    %380 = vmatpush1.msra.mxu0 0.0
    %381 = vmatprep.subr.mxu0 0.0
    %382 = vmatpush1.msra.mxu0 0.0
    %383 = vmatprep.subr.mxu0 0.0
    %384 = vmatpush1.msra.mxu0 0.0
    %385 = vmatprep.subr.mxu0 0.0
    %386 = vmatpush1.msra.mxu0 0.0
    %387 = vmatprep.subr.mxu0 0.0
    %388 = vmatpush1.msra.mxu0 0.0
    %389 = vmatprep.subr.mxu0 0.0
    %390 = vmatpush1.msra.mxu0 0.0
    %391 = vmatprep.subr.mxu0 0.0
    %392 = vmatpush1.msra.mxu0 0.0
    %393 = vmatprep.subr.mxu0 0.0
    %394 = vmatpush1.msra.mxu0 %v357
    %395 = vmatprep.subr.mxu0 0.0
    %396 = vmatpush1.msra.mxu0 %v356
    %397 = vmatprep.subr.mxu0 0.0
    %398 = vmatpush1.msra.mxu0 %v355
    %399 = vmatprep.subr.mxu0 0.0
    %400 = vmatpush1.msra.mxu0 %v354
    %401 = vmatprep.subr.mxu0 0.0
    %402 = vmatpush2.msra.mxu0 0.0
    %403 = vmatprep.subr.mxu0 0.0
    %404 = vmatpush2.msra.mxu0 0.0
    %405 = vmatprep.subr.mxu0 0.0
    %406 = vmatpush2.msra.mxu0 0.0
    %407 = vmatprep.subr.mxu0 0.0
    %408 = vmatpush2.msra.mxu0 0.0
    %409 = vmatprep.subr.mxu0 0.0
    %410 = vmatpush2.msra.mxu0 0.0
    %411 = vmatprep.subr.mxu0 0.0
    %412 = vmatpush2.msra.mxu0 0.0
    %413 = vmatprep.subr.mxu0 0.0
    %414 = vmatpush2.msra.mxu0 0.0
    %415 = vmatprep.subr.mxu0 0.0
    %416 = vmatpush2.msra.mxu0 0.0
    %417 = vmatprep.subr.mxu0 0.0
    %418 = vmatpush2.msra.mxu0 0.0
    %419 = vmatprep.subr.mxu0 0.0
    %420 = vmatpush2.msra.mxu0 0.0
    %421 = vmatprep.subr.mxu0 0.0
    %422 = vmatpush2.msra.mxu0 0.0
    %423 = vmatprep.subr.mxu0 0.0
    %424 = vmatpush2.msra.mxu0 0.0
    %425 = vmatprep.subr.mxu0 0.0
    %426 = vmatpush2.msra.mxu0 0.0
    %427 = vmatprep.subr.mxu0 0.0
    %428 = vmatpush2.msra.mxu0 0.0
    %429 = vmatprep.subr.mxu0 0.0
    %430 = vmatpush2.msra.mxu0 0.0
    %431 = vmatprep.subr.mxu0 0.0
    %432 = vmatpush2.msra.mxu0 0.0
    %433 = vmatprep.mubr.f32.mxu0 0.0
    %434 = vmatmul.mubr.f32.gmra.mxu0 %v367
    %v435 = vpop.f32.mrf.mxu0
    %v436 = vadd.f32 %v363, %v435
    %v437 = vpop.f32.mrf.mxu0
    %438 = vdwg.mxu0
    %v439 = vmul.f32 %v436, 0.5
    %v440 = vmul.f32 %v439, 1.442695
    %v441 = vpow.pop %v440
    %443 = vrot.lane.b32.xlu0 %v441, 120
    %v444 = vpop.permute.xlu0 %443
    %v446 = vmul.f32 %v48, %v444
    %v447 = vadd.f32 %v436, %v446
    %v448 = vld [vmem:[#allocation4 + $0x1d0] sm:$0xff]
    %v449 = vld [vmem:[#allocation2 + $0x8] sm:$0x1]
    %v451 = vlaneseq
    %v452 = vshrl.u32 %v451, 7
    %v453 = vsub.s32 0, %v452
    %v454 = vrot.slane %v449, %v453
    %v456 = vmul.f32 %v57, %v454
    %v458 = vsel %vm279, %v447, 0
    %460 = vmatprep.subr.mxu0 0.0
    %461 = vmatpush1.msra.mxu0 0.0
    %462 = vmatprep.subr.mxu0 0.0
    %463 = vmatpush1.msra.mxu0 0.0
    %464 = vmatprep.subr.mxu0 0.0
    %465 = vmatpush1.msra.mxu0 0.0
    %466 = vmatprep.subr.mxu0 0.0
    %467 = vmatpush1.msra.mxu0 0.0
    %468 = vmatprep.subr.mxu0 0.0
    %469 = vmatpush1.msra.mxu0 0.0
    %470 = vmatprep.subr.mxu0 0.0
    %471 = vmatpush1.msra.mxu0 0.0
    %472 = vmatprep.subr.mxu0 0.0
    %473 = vmatpush1.msra.mxu0 0.0
    %474 = vmatprep.subr.mxu0 0.0
    %475 = vmatpush1.msra.mxu0 0.0
    %476 = vmatprep.subr.mxu0 0.0
    %477 = vmatpush1.msra.mxu0 0.0
    %478 = vmatprep.subr.mxu0 0.0
    %479 = vmatpush1.msra.mxu0 0.0
    %480 = vmatprep.subr.mxu0 0.0
    %481 = vmatpush1.msra.mxu0 0.0
    %482 = vmatprep.subr.mxu0 0.0
    %483 = vmatpush1.msra.mxu0 0.0
    %484 = vmatprep.subr.mxu0 0.0
    %485 = vmatpush1.msra.mxu0 0.0
    %486 = vmatprep.subr.mxu0 0.0
    %487 = vmatpush1.msra.mxu0 0.0
    %488 = vmatprep.subr.mxu0 0.0
    %489 = vmatpush1.msra.mxu0 0.0
    %490 = vmatprep.subr.mxu0 0.0
    %491 = vmatpush1.msra.mxu0 %v448
    %492 = vmatprep.subr.mxu0 0.0
    %493 = vmatpush2.msra.mxu0 0.0
    %494 = vmatprep.subr.mxu0 0.0
    %495 = vmatpush2.msra.mxu0 0.0
    %496 = vmatprep.subr.mxu0 0.0
    %497 = vmatpush2.msra.mxu0 0.0
    %498 = vmatprep.subr.mxu0 0.0
    %499 = vmatpush2.msra.mxu0 0.0
    %500 = vmatprep.subr.mxu0 0.0
    %501 = vmatpush2.msra.mxu0 0.0
    %502 = vmatprep.subr.mxu0 0.0
    %503 = vmatpush2.msra.mxu0 0.0
    %504 = vmatprep.subr.mxu0 0.0
    %505 = vmatpush2.msra.mxu0 0.0
    %506 = vmatprep.subr.mxu0 0.0
    %507 = vmatpush2.msra.mxu0 0.0
    %508 = vmatprep.subr.mxu0 0.0
    %509 = vmatpush2.msra.mxu0 0.0
    %510 = vmatprep.subr.mxu0 0.0
    %511 = vmatpush2.msra.mxu0 0.0
    %512 = vmatprep.subr.mxu0 0.0
    %513 = vmatpush2.msra.mxu0 0.0
    %514 = vmatprep.subr.mxu0 0.0
    %515 = vmatpush2.msra.mxu0 0.0
    %516 = vmatprep.subr.mxu0 0.0
    %517 = vmatpush2.msra.mxu0 0.0
    %518 = vmatprep.subr.mxu0 0.0
    %519 = vmatpush2.msra.mxu0 0.0
    %520 = vmatprep.subr.mxu0 0.0
    %521 = vmatpush2.msra.mxu0 0.0
    %522 = vmatprep.subr.mxu0 0.0
    %523 = vmatpush2.msra.mxu0 0.0
    %524 = vmatprep.mubr.f32.mxu0 0.0
    %525 = vmatmul.mubr.f32.gmra.mxu0 %v458
    %v526 = vpop.f32.mrf.mxu0
    %v527 = vadd.f32 %v456, %v526
    %v528 = vpop.f32.mrf.mxu0
    %529 = vdwg.mxu0
    %v530 = vld [vmem:[#allocation2 + $0x7] sm:$0x1]
    %v532 = vlaneseq
    %v533 = vshrl.u32 %v532, 7
    %v534 = vsub.s32 0, %v533
    %v535 = vrot.slane %v530, %v534
    %v537 = vadd.f32 %v527, %v535
    %v538 = vmax.f32 %v537, 0.0
    %v539 = vld [vmem:[#allocation4 + $0x1e0] sm:$0xff]
    %v540 = vld [vmem:[#allocation4 + $0x1f0] sm:$0xff]
    %v541 = vld [vmem:[#allocation4 + $0x200] sm:$0xff]
    %v542 = vld [vmem:[#allocation4 + $0x210] sm:$0xff]
    %v543 = vld [vmem:[#allocation4 + $0x220] sm:$0xff]
    %v544 = vld [vmem:[#allocation4 + $0x230] sm:$0xff]
    %v545 = vld [vmem:[#allocation4 + $0x240] sm:$0xff]
    %v546 = vld [vmem:[#allocation4 + $0x250] sm:$0xff]
    %v547 = vld [vmem:[#allocation4 + $0x260] sm:$0xff]
    %v548 = vld [vmem:[#allocation4 + $0x270] sm:$0xff]
    %v549 = vld [vmem:[#allocation4 + $0x280] sm:$0xff]
    %v550 = vld [vmem:[#allocation4 + $0x290] sm:$0x3]
    %v551 = vld [vmem:[#allocation2 + $0x9] sm:$0x1]
    %v553 = vlaneseq
    %v554 = vshrl.u32 %v553, 7
    %v555 = vsub.s32 0, %v554
    %v556 = vrot.slane %v551, %v555
    %vm558 = vcmask 736256
    %v560 = vsel %vm558, %v538, 0
    %v563 = vsel %vm196, %v550, 0
    %565 = vmatprep.subr.mxu0 0.0
    %566 = vmatpush1.msra.mxu0 0.0
    %567 = vmatprep.subr.mxu0 0.0
    %568 = vmatpush1.msra.mxu0 0.0
    %569 = vmatprep.subr.mxu0 0.0
    %570 = vmatpush1.msra.mxu0 0.0
    %571 = vmatprep.subr.mxu0 0.0
    %572 = vmatpush1.msra.mxu0 0.0
    %573 = vmatprep.subr.mxu0 0.0
    %574 = vmatpush1.msra.mxu0 %v563
    %575 = vmatprep.subr.mxu0 0.0
    %576 = vmatpush1.msra.mxu0 %v549
    %577 = vmatprep.subr.mxu0 0.0
    %578 = vmatpush1.msra.mxu0 %v548
    %579 = vmatprep.subr.mxu0 0.0
    %580 = vmatpush1.msra.mxu0 %v547
    %581 = vmatprep.subr.mxu0 0.0
    %582 = vmatpush1.msra.mxu0 %v546
    %583 = vmatprep.subr.mxu0 0.0
    %584 = vmatpush1.msra.mxu0 %v545
    %585 = vmatprep.subr.mxu0 0.0
    %586 = vmatpush1.msra.mxu0 %v544
    %587 = vmatprep.subr.mxu0 0.0
    %588 = vmatpush1.msra.mxu0 %v543
    %589 = vmatprep.subr.mxu0 0.0
    %590 = vmatpush1.msra.mxu0 %v542
    %591 = vmatprep.subr.mxu0 0.0
    %592 = vmatpush1.msra.mxu0 %v541
    %593 = vmatprep.subr.mxu0 0.0
    %594 = vmatpush1.msra.mxu0 %v540
    %595 = vmatprep.subr.mxu0 0.0
    %596 = vmatpush1.msra.mxu0 %v539
    %597 = vmatprep.subr.mxu0 0.0
    %598 = vmatpush2.msra.mxu0 0.0
    %599 = vmatprep.subr.mxu0 0.0
    %600 = vmatpush2.msra.mxu0 0.0
    %601 = vmatprep.subr.mxu0 0.0
    %602 = vmatpush2.msra.mxu0 0.0
    %603 = vmatprep.subr.mxu0 0.0
    %604 = vmatpush2.msra.mxu0 0.0
    %605 = vmatprep.subr.mxu0 0.0
    %606 = vmatpush2.msra.mxu0 0.0
    %607 = vmatprep.subr.mxu0 0.0
    %608 = vmatpush2.msra.mxu0 0.0
    %609 = vmatprep.subr.mxu0 0.0
    %610 = vmatpush2.msra.mxu0 0.0
    %611 = vmatprep.subr.mxu0 0.0
    %612 = vmatpush2.msra.mxu0 0.0
    %613 = vmatprep.subr.mxu0 0.0
    %614 = vmatpush2.msra.mxu0 0.0
    %615 = vmatprep.subr.mxu0 0.0
    %616 = vmatpush2.msra.mxu0 0.0
    %617 = vmatprep.subr.mxu0 0.0
    %618 = vmatpush2.msra.mxu0 0.0
    %619 = vmatprep.subr.mxu0 0.0
    %620 = vmatpush2.msra.mxu0 0.0
    %621 = vmatprep.subr.mxu0 0.0
    %622 = vmatpush2.msra.mxu0 0.0
    %623 = vmatprep.subr.mxu0 0.0
    %624 = vmatpush2.msra.mxu0 0.0
    %625 = vmatprep.subr.mxu0 0.0
    %626 = vmatpush2.msra.mxu0 0.0
    %627 = vmatprep.subr.mxu0 0.0
    %628 = vmatpush2.msra.mxu0 0.0
    %629 = vmatprep.mubr.f32.mxu0 0.0
    %630 = vmatmul.mubr.f32.gmra.mxu0 %v560
    %v631 = vpop.f32.mrf.mxu0
    %v632 = vadd.f32 %v556, %v631
    %v633 = vpop.f32.mrf.mxu0
    %634 = vdwg.mxu0
    %v635 = vtanh.pop %v632
    %v636 = vld [vmem:[#allocation4 + $0x2a0] sm:$0xff]
    %v637 = vld [vmem:[#allocation4 + $0x2b0] sm:$0xff]
    %v638 = vld [vmem:[#allocation4 + $0x2c0] sm:$0xff]
    %v639 = vld [vmem:[#allocation4 + $0x2d0] sm:$0xff]
    %v640 = vld [vmem:[#allocation4 + $0x2e0] sm:$0xf]
    %v641 = vld [vmem:[#allocation2 + $0xa] sm:$0x1]
    %v643 = vlaneseq
    %v644 = vshrl.u32 %v643, 7
    %v645 = vsub.s32 0, %v644
    %v646 = vrot.slane %v641, %v645
    %vm648 = vcmask 293888
    %v650 = vsel %vm648, %v635, 0
    %vm652 = vcmask 1043456
    %v654 = vsel %vm652, %v640, 0
    %656 = vmatprep.subr.mxu0 0.0
    %657 = vmatpush1.msra.mxu0 0.0
    %658 = vmatprep.subr.mxu0 0.0
    %659 = vmatpush1.msra.mxu0 0.0
    %660 = vmatprep.subr.mxu0 0.0
    %661 = vmatpush1.msra.mxu0 0.0
    %662 = vmatprep.subr.mxu0 0.0
    %663 = vmatpush1.msra.mxu0 0.0
    %664 = vmatprep.subr.mxu0 0.0
    %665 = vmatpush1.msra.mxu0 0.0
    %666 = vmatprep.subr.mxu0 0.0
    %667 = vmatpush1.msra.mxu0 0.0
    %668 = vmatprep.subr.mxu0 0.0
    %669 = vmatpush1.msra.mxu0 0.0
    %670 = vmatprep.subr.mxu0 0.0
    %671 = vmatpush1.msra.mxu0 0.0
    %672 = vmatprep.subr.mxu0 0.0
    %673 = vmatpush1.msra.mxu0 0.0
    %674 = vmatprep.subr.mxu0 0.0
    %675 = vmatpush1.msra.mxu0 0.0
    %676 = vmatprep.subr.mxu0 0.0
    %677 = vmatpush1.msra.mxu0 0.0
    %678 = vmatprep.subr.mxu0 0.0
    %679 = vmatpush1.msra.mxu0 %v654
    %680 = vmatprep.subr.mxu0 0.0
    %681 = vmatpush1.msra.mxu0 %v639
    %682 = vmatprep.subr.mxu0 0.0
    %683 = vmatpush1.msra.mxu0 %v638
    %684 = vmatprep.subr.mxu0 0.0
    %685 = vmatpush1.msra.mxu0 %v637
    %686 = vmatprep.subr.mxu0 0.0
    %687 = vmatpush1.msra.mxu0 %v636
    %688 = vmatprep.subr.mxu0 0.0
    %689 = vmatpush2.msra.mxu0 0.0
    %690 = vmatprep.subr.mxu0 0.0
    %691 = vmatpush2.msra.mxu0 0.0
    %692 = vmatprep.subr.mxu0 0.0
    %693 = vmatpush2.msra.mxu0 0.0
    %694 = vmatprep.subr.mxu0 0.0
    %695 = vmatpush2.msra.mxu0 0.0
    %696 = vmatprep.subr.mxu0 0.0
    %697 = vmatpush2.msra.mxu0 0.0
    %698 = vmatprep.subr.mxu0 0.0
    %699 = vmatpush2.msra.mxu0 0.0
    %700 = vmatprep.subr.mxu0 0.0
    %701 = vmatpush2.msra.mxu0 0.0
    %702 = vmatprep.subr.mxu0 0.0
    %703 = vmatpush2.msra.mxu0 0.0
    %704 = vmatprep.subr.mxu0 0.0
    %705 = vmatpush2.msra.mxu0 0.0
    %706 = vmatprep.subr.mxu0 0.0
    %707 = vmatpush2.msra.mxu0 0.0
    %708 = vmatprep.subr.mxu0 0.0
    %709 = vmatpush2.msra.mxu0 0.0
    %710 = vmatprep.subr.mxu0 0.0
    %711 = vmatpush2.msra.mxu0 0.0
    %712 = vmatprep.subr.mxu0 0.0
    %713 = vmatpush2.msra.mxu0 0.0
    %714 = vmatprep.subr.mxu0 0.0
    %715 = vmatpush2.msra.mxu0 0.0
    %716 = vmatprep.subr.mxu0 0.0
    %717 = vmatpush2.msra.mxu0 0.0
    %718 = vmatprep.subr.mxu0 0.0
    %719 = vmatpush2.msra.mxu0 0.0
    %720 = vmatprep.mubr.f32.mxu0 0.0
    %721 = vmatmul.mubr.f32.gmra.mxu0 %v650
    %v722 = vpop.f32.mrf.mxu0
    %v723 = vadd.f32 %v646, %v722
    %v724 = vpop.f32.mrf.mxu0
    %725 = vdwg.mxu0
    %727 = vrot.lane.b32.xlu0 %v436, 16
    %v728 = vpop.permute.xlu0 %727
    %v730 = vsel %vm72, %v723, %v728
    %731 = vst.msk [vmem:[%s5] sm:$0xff] %vm365, %v730
    // Predicated region
    $region30: #{vae_forward.1} parent=1 // pred_check
      _
    $region31: #{vae_forward.1} parent=1 // pred_check_branch
      %733 = sbr.rel (0) target = $region33
    $region32: #{vae_forward.1} parent=1 // pred_region
      _
    $region33: #{vae_forward.1} parent=1 // pred_fallthru
      _
    // Predicated region
    $region34: #{vae_forward.1} parent=1 // pred_check
      _
    $region35: #{vae_forward.1} parent=1 // pred_check_branch
      %735 = sbr.rel (0) target = $region37
    $region36: #{vae_forward.1} parent=1 // pred_region
      _
    $region37: #{vae_forward.1} parent=1 // pred_fallthru
      _
    %736 = vsyncpa [#allocation3], 1
    %737 = vsyncpa [#allocation5], 1

</llo_original>
